<compile_context>
chip_gen: v7x
topology: tpu7x:2x2x1
jax: 0.10.0
libtpu: 0.0.40
codegen_flags: <defaults>
</compile_context>

<pallas_src>
import functools

import numpy as np
import jax
import jax.numpy as jnp
from jax.experimental import pallas as pl
from jax.experimental.pallas import tpu as pltpu


def _round_up(x, m):
    return ((x + m - 1) // m) * m


def _rbf_kernel(field_ref, trig_ref, w_ref, b_ref, o_ref, *, scale):
    # field_ref: (T, nfr)   trig: (2*nfr, Fr)   w: (Fr, Dr)   b: (1, Dr)   o: (T, Dr)
    f = field_ref[...]
    cs = jnp.concatenate([jnp.cos(f), jnp.sin(f)], axis=-1)          # (T, 2*nfr)
    cos_diff = jnp.dot(cs, trig_ref[...],                            # cos(field - c_k) grid
                       preferred_element_type=jnp.float32)           # (T, Fr)
    feat = jnp.exp((cos_diff - 1.0) * scale)                         # smooth RBF binning
    out = jnp.dot(feat, w_ref[...], preferred_element_type=jnp.float32) + b_ref[...]
    o_ref[...] = out.astype(o_ref.dtype)


def _rbf_kernel_masked(fm_ref, trig_ref, emask_ref, w_ref, b_ref, o_ref, *, scale, nfr):
    # fm_ref: (T, 2*nfr) = [field | mask] fused into one tile (one DMA per step).
    x = fm_ref[...]
    f = x[:, :nfr]
    m = x[:, nfr:]
    cs = jnp.concatenate([jnp.cos(f), jnp.sin(f)], axis=-1)          # (T, 2*nfr)
    cos_diff = jnp.dot(cs, trig_ref[...], preferred_element_type=jnp.float32)
    feat = jnp.exp((cos_diff - 1.0) * scale)
    # Replicate mask over bins with the constant block-diag ones matrix (MXU, nearly free).
    feat = feat * jnp.dot(m, emask_ref[...], preferred_element_type=jnp.float32)
    out = jnp.dot(feat, w_ref[...], preferred_element_type=jnp.float32) + b_ref[...]
    o_ref[...] = out.astype(o_ref.dtype)


def node_field_rbf(field, W, b, num_field_bins, bin_scale=2.0, mask_field=None,
                   tile_rows=4096, out_dtype=jnp.float32):
    """field: (B, G, num_field) f32; W: (F, dim_out); b: (dim_out,). Returns (B, G, dim_out)."""
    B, G, nf = field.shape
    nb = int(num_field_bins)
    if nb < 2:
        # cos(0) - cos(2*pi/nb) == 0 for nb == 1 -> division by zero (same issue as PyTorch ref).
        raise ValueError("num_field_bins must be >= 2")
    F = nf * nb
    D = W.shape[1]
    assert W.shape[0] == F
    N = B * G

    # Lane-dense repack factor: pack R consecutive (b, g) rows into one kernel row so the
    # output tile is R*D lanes (dense 128-lane stores for D=32) and the main matmul is a
    # clean (K=R*F, N=R*D) MXU tile.
    R = max(1, 128 // D)
    nfr = R * nf          # field columns per repacked row
    Fr = R * F            # feature columns per repacked row
    Dr = R * D            # output columns per repacked row

    delta_adjacent = np.cos(0.0) - np.cos(2.0 * np.pi / nb)
    scale = float(bin_scale / delta_adjacent)

    # ---- constant expansion tables ----
    centers = np.arange(nb, dtype=np.float64) * (2.0 * np.pi / nb)
    eye_nf = np.eye(nf, dtype=np.float64)
    e_cos = np.kron(eye_nf, np.cos(centers)[None, :])                 # (nf, F)
    e_sin = np.kron(eye_nf, np.sin(centers)[None, :])                 # (nf, F)
    eye_R = np.eye(R, dtype=np.float64)
    # Fused trig expansion: [cos_f | sin_f] (T, 2*nfr) @ trig (2*nfr, Fr) -> cos(f - c_k).
    trig = np.concatenate([np.kron(eye_R, e_cos), np.kron(eye_R, e_sin)],
                          axis=0).astype(np.float32)                  # (2*nfr, Fr)
    e_msk = np.kron(np.eye(nfr), np.ones((1, nb))).astype(np.float32) # (nfr, Fr)

    W32 = W.astype(jnp.float32)
    W_bd = jnp.kron(jnp.eye(R, dtype=jnp.float32), W32)               # (Fr, Dr) block-diagonal
    b_rep = jnp.tile(b.astype(jnp.float32).reshape(1, D), (1, R))     # (1, Dr)

    have_mask = mask_field is not None
    n_in_cols = 2 * nfr if have_mask else nfr

    # ---- tile sizing (rows are repacked rows) ----
    Nr = -(-N // R)                                                   # ceil(N / R)
    t = max(8, _round_up(min(max(int(tile_rows) // R, 8), max(Nr, 1)), 8))
    # Keep >= 2 grid steps when there is enough work so v7x's 2 TCs both get shards.
    if Nr > 8:
        t = min(t, max(8, _round_up(-(-Nr // 2), 8)))
    # VMEM sanity: double-buffered in/out tiles (lane-padded to 128) stay well under the
    # default scoped VMEM limit on every generation (v7x: 32 MiB default / 64 MiB physical).
    def _footprint(tr):
        lane = lambda c: _round_up(c, 128)
        return 4 * 2 * tr * (lane(n_in_cols) + lane(Dr))
    while t > 8 and _footprint(t) > 16 * 1024 * 1024:
        t = max(8, _round_up(t // 2, 8))

    Nr_pad = _round_up(Nr, t)
    N_pad = Nr_pad * R
    grid = (Nr_pad // t,)

    # ---- inputs: free contiguous reshapes into the repacked layout ----
    field_2d = field.reshape(N, nf).astype(jnp.float32)
    if N_pad != N:
        field_2d = jnp.pad(field_2d, ((0, N_pad - N), (0, 0)))
    field_rep = field_2d.reshape(Nr_pad, nfr)

    if have_mask:
        mask_2d = mask_field.reshape(N, nf).astype(jnp.float32)
        if N_pad != N:
            mask_2d = jnp.pad(mask_2d, ((0, N_pad - N), (0, 0)))
        mask_rep = mask_2d.reshape(Nr_pad, nfr)
        fm = jnp.concatenate([field_rep, mask_rep], axis=1)           # (Nr_pad, 2*nfr)

    const_spec = lambda shape: pl.BlockSpec(shape, lambda i: (0, 0))
    in_row_spec = pl.BlockSpec((t, n_in_cols), lambda i: (i, 0))
    out_spec = pl.BlockSpec((t, Dr), lambda i: (i, 0))

    # Advisory cost estimate (flops counted as the MXU actually executes them).
    flops = 2 * Nr_pad * (2 * nfr) * Fr + 2 * Nr_pad * Fr * Dr
    if have_mask:
        flops += 2 * Nr_pad * nfr * Fr + Nr_pad * Fr
    transcendentals = Nr_pad * (2 * nfr + Fr)
    out_itemsize = np.dtype(out_dtype).itemsize
    bytes_accessed = (Nr_pad * n_in_cols * 4 + Nr_pad * Dr * out_itemsize
                      + (trig.size + Fr * Dr + Dr + (e_msk.size if have_mask else 0)) * 4)
    cost = pl.CostEstimate(flops=flops, transcendentals=transcendentals,
                           bytes_accessed=bytes_accessed)

    if have_mask:
        kernel = functools.partial(_rbf_kernel_masked, scale=scale, nfr=nfr)
        in_specs = [in_row_spec,
                    const_spec((2 * nfr, Fr)), const_spec((nfr, Fr)),
                    const_spec((Fr, Dr)), const_spec((1, Dr))]
        args = (fm, jnp.asarray(trig), jnp.asarray(e_msk), W_bd, b_rep)
    else:
        kernel = functools.partial(_rbf_kernel, scale=scale)
        in_specs = [in_row_spec,
                    const_spec((2 * nfr, Fr)),
                    const_spec((Fr, Dr)), const_spec((1, Dr))]
        args = (field_rep, jnp.asarray(trig), W_bd, b_rep)

    out = pl.pallas_call(
        kernel,
        out_shape=jax.ShapeDtypeStruct((Nr_pad, Dr), out_dtype),
        grid_spec=pltpu.PrefetchScalarGridSpec(
            num_scalar_prefetch=0,
            grid=grid,
            in_specs=in_specs,
            out_specs=out_spec,
        ),
        compiler_params=pltpu.CompilerParams(
            dimension_semantics=("parallel",)),
        cost_estimate=cost,
    )(*args)

    # Free reshapes back: (Nr_pad, R*D) -> (N_pad, D) -> slice -> (B, G, D).
    # TODO(synk): if the cos/sin VALU stage is still the binding slot after this repack
    # (nfr = 16 of 128 lanes), a further lane-dense relayout of the trig stage could help.
    return out.reshape(N_pad, D)[:N].reshape(B, G, D)


def node_field_rbf_reference(field, W, b, num_field_bins, bin_scale=2.0, mask_field=None):
    """Pure-JAX reference mirroring the PyTorch forward."""
    B, G, nf = field.shape
    nb = num_field_bins
    centers = jnp.arange(nb, dtype=jnp.float32) * (2.0 * np.pi / nb)
    centers = centers.reshape(1, 1, 1, nb)
    delta_adjacent = np.cos(0.0) - np.cos(2.0 * np.pi / nb)
    cosine = jnp.cos(field[..., None] - centers)
    feat = jnp.exp((cosine - 1.0) * bin_scale / delta_adjacent)
    if mask_field is not None:
        feat = mask_field[..., None] * feat
    feat = feat.reshape(B, G, nf * nb)
    return feat @ W + b


if __name__ == "__main__":
    # Module hyper-params (small, consistent with the forward's shape contract)
    dim_out = 32
    num_field = 4
    num_field_bins = 8
    bin_scale = 2.0

    key = jax.random.PRNGKey(0)
    k_field, k_w, k_b, k_mask, k_field2 = jax.random.split(key, 5)

    F = num_field * num_field_bins
    bound = 1.0 / np.sqrt(F)
    W = jax.random.uniform(k_w, (F, dim_out), dtype=jnp.float32, minval=-bound, maxval=bound)
    b = jax.random.uniform(k_b, (dim_out,), dtype=jnp.float32, minval=-bound, maxval=bound)

    # --- Case 1: masked, B*G a multiple of the repack factor ---
    B, G = 2, 16
    field = jax.random.uniform(
        k_field, (B, G, num_field), dtype=jnp.float32, minval=0.0, maxval=2.0 * np.pi)
    mask_field = (jax.random.uniform(k_mask, (B, G, num_field)) > 0.2).astype(jnp.float32)

    out = node_field_rbf(field, W, b, num_field_bins,
                         bin_scale=bin_scale, mask_field=mask_field)
    out = jax.block_until_ready(out)
    ref = node_field_rbf_reference(field, W, b, num_field_bins,
                                   bin_scale=bin_scale, mask_field=mask_field)
    assert out.shape == (B, G, dim_out)
    np.testing.assert_allclose(np.asarray(out), np.asarray(ref), rtol=1e-5, atol=1e-5)

    # --- Case 2: no mask, B*G not a multiple of the repack factor or tile (padding path) ---
    B2, G2 = 3, 10
    field2 = jax.random.uniform(
        k_field2, (B2, G2, num_field), dtype=jnp.float32, minval=0.0, maxval=2.0 * np.pi)
    out2 = node_field_rbf(field2, W, b, num_field_bins, bin_scale=bin_scale, mask_field=None)
    out2 = jax.block_until_ready(out2)
    ref2 = node_field_rbf_reference(field2, W, b, num_field_bins,
                                    bin_scale=bin_scale, mask_field=None)
    assert out2.shape == (B2, G2, dim_out)
    np.testing.assert_allclose(np.asarray(out2), np.asarray(ref2), rtol=1e-5, atol=1e-5)

    print("KERNEL_OK")
</pallas_src>

<mosaic_0001>
module attributes {stable_mosaic.version = 11 : i64} {
  func.func @_rbf_kernel_masked(%arg0: i32, %arg1: memref<8x32xf32, #tpu.memory_space<vmem>>, %arg2: memref<32x128xf32, #tpu.memory_space<vmem>>, %arg3: memref<16x128xf32, #tpu.memory_space<vmem>>, %arg4: memref<128x128xf32, #tpu.memory_space<vmem>>, %arg5: memref<1x128xf32, #tpu.memory_space<vmem>>, %arg6: memref<8x128xf32, #tpu.memory_space<vmem>>) attributes {dimension_semantics = [#tpu.dimension_semantics<parallel>], iteration_bounds = array<i64: 1>, scalar_prefetch = 0 : i64, scratch_operands = 0 : i64, tpu.core_type = #tpu.core_type<tc>, window_params = [{transform_indices = @transform_0, window_bounds = array<i64: 8, 32>}, {pipeline_mode = #tpu.pipeline_mode<synchronous>, transform_indices = @transform_1, window_bounds = array<i64: 32, 128>}, {pipeline_mode = #tpu.pipeline_mode<synchronous>, transform_indices = @transform_2, window_bounds = array<i64: 16, 128>}, {pipeline_mode = #tpu.pipeline_mode<synchronous>, transform_indices = @transform_3, window_bounds = array<i64: 128, 128>}, {pipeline_mode = #tpu.pipeline_mode<synchronous>, transform_indices = @transform_4, window_bounds = array<i64: 1, 128>}, {transform_indices = @transform_5, window_bounds = array<i64: 8, 128>}]} {
    %c0 = arith.constant 0 : index
    %c0_0 = arith.constant 0 : index
    %0 = vector.load %arg1[%c0, %c0_0] : memref<8x32xf32, #tpu.memory_space<vmem>>, vector<8x32xf32>
    %1 = vector.extract_strided_slice %0 {offsets = [0, 0], sizes = [8, 16], strides = [1, 1]} : vector<8x32xf32> to vector<8x16xf32>
    %2 = vector.extract_strided_slice %0 {offsets = [0, 16], sizes = [8, 16], strides = [1, 1]} : vector<8x32xf32> to vector<8x16xf32>
    %3 = math.cos %1 : vector<8x16xf32>
    %4 = math.sin %1 : vector<8x16xf32>
    %5 = tpu.concatenate %3, %4 in 1 : vector<8x16xf32>, vector<8x16xf32> -> vector<8x32xf32>
    %c0_1 = arith.constant 0 : index
    %c0_2 = arith.constant 0 : index
    %6 = vector.load %arg2[%c0_1, %c0_2] : memref<32x128xf32, #tpu.memory_space<vmem>>, vector<32x128xf32>
    %cst = arith.constant dense<0.000000e+00> : vector<8x128xf32>
    %7 = tpu.matmul %5, %6, %cst {dimension_numbers = #tpu.dot_dimension_numbers<[1], [0], [0], [1], [0, 0, 1, 1], [], []>} : vector<8x32xf32>, vector<32x128xf32>, vector<8x128xf32> -> vector<8x128xf32>
    %cst_3 = arith.constant 1.000000e+00 : f32
    %8 = vector.broadcast %cst_3 : f32 to vector<8x128xf32>
    %9 = arith.subf %7, %8 : vector<8x128xf32>
    %cst_4 = arith.constant 6.82842731 : f32
    %10 = vector.broadcast %cst_4 : f32 to vector<8x128xf32>
    %11 = arith.mulf %9, %10 : vector<8x128xf32>
    %12 = math.exp %11 : vector<8x128xf32>
    %c0_5 = arith.constant 0 : index
    %c0_6 = arith.constant 0 : index
    %13 = vector.load %arg3[%c0_5, %c0_6] : memref<16x128xf32, #tpu.memory_space<vmem>>, vector<16x128xf32>
    %cst_7 = arith.constant dense<0.000000e+00> : vector<8x128xf32>
    %14 = tpu.matmul %2, %13, %cst_7 {dimension_numbers = #tpu.dot_dimension_numbers<[1], [0], [0], [1], [0, 0, 1, 1], [], []>} : vector<8x16xf32>, vector<16x128xf32>, vector<8x128xf32> -> vector<8x128xf32>
    %15 = arith.mulf %12, %14 : vector<8x128xf32>
    %c0_8 = arith.constant 0 : index
    %c0_9 = arith.constant 0 : index
    %16 = vector.load %arg4[%c0_8, %c0_9] : memref<128x128xf32, #tpu.memory_space<vmem>>, vector<128x128xf32>
    %cst_10 = arith.constant dense<0.000000e+00> : vector<8x128xf32>
    %17 = tpu.matmul %15, %16, %cst_10 {dimension_numbers = #tpu.dot_dimension_numbers<[1], [0], [0], [1], [0, 0, 1, 1], [], []>} : vector<8x128xf32>, vector<128x128xf32>, vector<8x128xf32> -> vector<8x128xf32>
    %c0_11 = arith.constant 0 : index
    %c0_12 = arith.constant 0 : index
    %18 = vector.load %arg5[%c0_11, %c0_12] : memref<1x128xf32, #tpu.memory_space<vmem>>, vector<1x128xf32>
    %19 = vector.broadcast %18 : vector<1x128xf32> to vector<8x128xf32>
    %20 = arith.addf %17, %19 : vector<8x128xf32>
    %c0_13 = arith.constant 0 : index
    %c0_14 = arith.constant 0 : index
    %21 = vector.load %arg6[%c0_13, %c0_14] : memref<8x128xf32, #tpu.memory_space<vmem>>, vector<8x128xf32>
    tpu.vector_store %arg6[%c0_13, %c0_14], %20 {strides = array<i32>} : memref<8x128xf32, #tpu.memory_space<vmem>>, vector<8x128xf32>,
    return
  }
  func.func @transform_0(%arg0: i32) -> (i32, i32) {
    %c0_i32 = arith.constant 0 : i32
    %c0_i32_0 = arith.constant 0 : i32
    return %arg0, %c0_i32 : i32, i32
  }
  func.func @transform_1(%arg0: i32) -> (i32, i32) {
    %c0_i32 = arith.constant 0 : i32
    %c0_i32_0 = arith.constant 0 : i32
    %c0_i32_1 = arith.constant 0 : i32
    return %c0_i32, %c0_i32_0 : i32, i32
  }
  func.func @transform_2(%arg0: i32) -> (i32, i32) {
    %c0_i32 = arith.constant 0 : i32
    %c0_i32_0 = arith.constant 0 : i32
    %c0_i32_1 = arith.constant 0 : i32
    return %c0_i32, %c0_i32_0 : i32, i32
  }
  func.func @transform_3(%arg0: i32) -> (i32, i32) {
    %c0_i32 = arith.constant 0 : i32
    %c0_i32_0 = arith.constant 0 : i32
    %c0_i32_1 = arith.constant 0 : i32
    return %c0_i32, %c0_i32_0 : i32, i32
  }
  func.func @transform_4(%arg0: i32) -> (i32, i32) {
    %c0_i32 = arith.constant 0 : i32
    %c0_i32_0 = arith.constant 0 : i32
    %c0_i32_1 = arith.constant 0 : i32
    return %c0_i32, %c0_i32_0 : i32, i32
  }
  func.func @transform_5(%arg0: i32) -> (i32, i32) {
    %c0_i32 = arith.constant 0 : i32
    %c0_i32_0 = arith.constant 0 : i32
    return %arg0, %c0_i32 : i32, i32
  }
}

</mosaic_0001>

<llo_original>
// kernel: tpu_custom_call.1
$region0: #{tpu_custom_call.1}
  #allocation0 [shape = 'u32[]', space=smem, size = 0x4, offset = 0x4, fixed_abs, tag = 'smem constant byte address 0x4 - core index']
  #allocation1 [shape = 'u32[144,128]{1,0:T(1,128)}', space=vmem, size = 0x12000, scoped, tag = 'internal scratch']
  %s0 = inlined_call_operand.hbm [shape: f32[8,32], index: 0, kind: input, shape index: {}]
  %s1 = inlined_call_operand.hbm [shape: f32[32,128], index: 1, kind: input, shape index: {}]
  %s2 = inlined_call_operand.hbm [shape: f32[16,128], index: 2, kind: input, shape index: {}]
  %s3 = inlined_call_operand.hbm [shape: f32[128,128], index: 3, kind: input, shape index: {}]
  %s4 = inlined_call_operand.vmem [shape: f32[1,128], index: 4, kind: input, shape index: {}]
  %s5 = inlined_call_operand.hbm [shape: f32[8,128], index: 5, kind: output, shape index: {}]
  %s6 = sld [smem:[#allocation0]]
  $region46: #{tpu_custom_call.1} parent=0
    _
  %s8 = ssub.s32 1, %s6
  %s9 = scalar_select 0, %s8, %s6
  $region1: #{tpu_custom_call.1} parent=0
    #allocation2 [shape = 'u8[4096]{0}', space=vmem, size = 0x1000, scoped, tag = 'input window, operand 0, single buffered']
    #allocation3 [shape = 's32[1]{0}', space=sflag, size = 0x4, scoped, tag = 'scoped memory for tpu_custom_call.1']
    #allocation4 [shape = 's32[1]{0}', space=sflag, size = 0x4, scoped, tag = 'scoped memory for tpu_custom_call.1']
    #allocation5 [shape = 'u8[16384]{0}', space=vmem, size = 0x4000, scoped, tag = 'input window, operand 1, single buffered']
    #allocation6 [shape = 's32[1]{0}', space=sflag, size = 0x4, scoped, tag = 'scoped memory for tpu_custom_call.1']
    #allocation7 [shape = 'u8[8192]{0}', space=vmem, size = 0x2000, scoped, tag = 'input window, operand 2, single buffered']
    #allocation8 [shape = 'u8[65536]{0}', space=vmem, size = 0x10000, scoped, tag = 'input window, operand 3, single buffered']
    #allocation9 [shape = 's32[1]{0}', space=sflag, size = 0x4, scoped, tag = 'scoped memory for tpu_custom_call.1']
    #allocation10 [shape = 'u8[4096]{0}', space=vmem, size = 0x1000, scoped, tag = 'output window, operand 0, single buffered']
    %10 = vsyncpa [#allocation3], 0
    %11 = vsyncpa [#allocation6], 0
    %12 = vsyncpa [#allocation9], 0
    %13 = vsyncpa [#allocation4], 0
    // Predicated region
    $region2: #{tpu_custom_call.1} parent=1 // pred_check
      _
    $region3: #{tpu_custom_call.1} parent=1 // pred_check_branch
      %15 = sbr.rel (0) target = $region5
    $region4: #{tpu_custom_call.1} parent=1 // pred_region
      %s17 = ssub.s32 128, 128
      %18 = vsyncadd [#allocation3], %s17
      %s20 = sshll.u32 [#allocation2], 4
      %s21 = int_to_ptr.vmem [resolvable:$true] %s20
      %23 = dma.hbm_to_vmem [thread:$0]  %s0, 128, %s21, [#allocation3]
    $region5: #{tpu_custom_call.1} parent=1 // pred_fallthru
      _
    // Predicated region
    $region6: #{tpu_custom_call.1} parent=1 // pred_check
      _
    $region7: #{tpu_custom_call.1} parent=1 // pred_check_branch
      %25 = sbr.rel (0) target = $region9
    $region8: #{tpu_custom_call.1} parent=1 // pred_region
      %s27 = ssub.s32 512, 512
      %28 = vsyncadd [#allocation6], %s27
      %s29 = sshll.u32 [#allocation5], 4
      %s30 = int_to_ptr.vmem [resolvable:$true] %s29
      %35 = dma.hbm_to_vmem [thread:$0]  %s1, 512, %s30, [#allocation6], 128, 128, 8
    $region9: #{tpu_custom_call.1} parent=1 // pred_fallthru
      _
    // Predicated region
    $region10: #{tpu_custom_call.1} parent=1 // pred_check
      _
    $region11: #{tpu_custom_call.1} parent=1 // pred_check_branch
      %37 = sbr.rel (0) target = $region13
    $region12: #{tpu_custom_call.1} parent=1 // pred_region
      %s39 = ssub.s32 256, 256
      %40 = vsyncadd [#allocation6], %s39
      %s41 = sshll.u32 [#allocation7], 4
      %s42 = int_to_ptr.vmem [resolvable:$true] %s41
      %47 = dma.hbm_to_vmem [thread:$0]  %s2, 256, %s42, [#allocation6], 128, 128, 8
    $region13: #{tpu_custom_call.1} parent=1 // pred_fallthru
      _
    // Predicated region
    $region14: #{tpu_custom_call.1} parent=1 // pred_check
      _
    $region15: #{tpu_custom_call.1} parent=1 // pred_check_branch
      %49 = sbr.rel (0) target = $region17
    $region16: #{tpu_custom_call.1} parent=1 // pred_region
      %s51 = ssub.s32 2048, 2048
      %52 = vsyncadd [#allocation9], %s51
      %s53 = sshll.u32 [#allocation8], 4
      %s54 = int_to_ptr.vmem [resolvable:$true] %s53
      %59 = dma.hbm_to_vmem [thread:$0]  %s3, 2048, %s54, [#allocation9], 128, 128, 8
    $region17: #{tpu_custom_call.1} parent=1 // pred_fallthru
      _
    // Predicated region
    $region18: #{tpu_custom_call.1} parent=1 // pred_check
      _
    $region19: #{tpu_custom_call.1} parent=1 // pred_check_branch
      %61 = sbr.rel (0) target = $region21
    $region20: #{tpu_custom_call.1} parent=1 // pred_region
      _
    $region21: #{tpu_custom_call.1} parent=1 // pred_fallthru
      _
    // Predicated region
    $region22: #{tpu_custom_call.1} parent=1 // pred_check
      _
    $region23: #{tpu_custom_call.1} parent=1 // pred_check_branch
      %63 = sbr.rel (0) target = $region25
    $region24: #{tpu_custom_call.1} parent=1 // pred_region
      %64 = dma.done [#allocation3], 128
    $region25: #{tpu_custom_call.1} parent=1 // pred_fallthru
      _
    // Predicated region
    $region26: #{tpu_custom_call.1} parent=1 // pred_check
      _
    $region27: #{tpu_custom_call.1} parent=1 // pred_check_branch
      %66 = sbr.rel (0) target = $region29
    $region28: #{tpu_custom_call.1} parent=1 // pred_region
      %67 = dma.done [#allocation6], 512
    $region29: #{tpu_custom_call.1} parent=1 // pred_fallthru
      _
    // Predicated region
    $region30: #{tpu_custom_call.1} parent=1 // pred_check
      _
    $region31: #{tpu_custom_call.1} parent=1 // pred_check_branch
      %69 = sbr.rel (0) target = $region33
    $region32: #{tpu_custom_call.1} parent=1 // pred_region
      %70 = dma.done [#allocation6], 256
    $region33: #{tpu_custom_call.1} parent=1 // pred_fallthru
      _
    // Predicated region
    $region34: #{tpu_custom_call.1} parent=1 // pred_check
      _
    $region35: #{tpu_custom_call.1} parent=1 // pred_check_branch
      %72 = sbr.rel (0) target = $region37
    $region36: #{tpu_custom_call.1} parent=1 // pred_region
      %73 = dma.done [#allocation9], 2048
    $region37: #{tpu_custom_call.1} parent=1 // pred_fallthru
      _
    %v74 = vld [vmem:[#allocation2] sm:$0xff]
    %v75 = vand.u32 2147483647, %v74
    %vm76 = vcmp.le.f32.partialorder %v75, 0.7853982
    %vm77 = vcmp.lt.s32.totalorder %v74, 0
    %v78 = vand.u32 %v74, 2139095040
    %v79 = vshrl.u32 %v78, 23
    %v80 = vsub.s32 %v79, 127
    %v81 = vand.u32 2147483647, %v74
    %v82 = vand.u32 %v81, 8388607
    %v83 = vor.u32 %v82, 8388608
    %v84 = vsub.s32 0, %v83
    %v85 = vadd.s32 %v80, 1
    %vm86 = vcmp.gt.s32.totalorder %v85, 0
    %v87 = vsel %vm86, %v85, 0
    %v88 = vshrl.u32 %v87, 5
    %v89 = vand.u32 %v87, 31
    %v90 = vsub.s32 32, %v89
    %v91 = vshrl.u32 683565275, %v90
    %v92 = vshll.u32 683565275, %v89
    %v93 = vshrl.u32 2475754826, %v90
    %v94 = vor.u32 %v92, %v93
    %v95 = vshll.u32 2475754826, %v89
    %v96 = vshrl.u32 2131351028, %v90
    %v97 = vor.u32 %v95, %v96
    %v98 = vshll.u32 2131351028, %v89
    %v99 = vshrl.u32 2102212464, %v90
    %v100 = vor.u32 %v98, %v99
    %v101 = vshll.u32 2102212464, %v89
    %v102 = vshrl.u32 920167782, %v90
    %v103 = vor.u32 %v101, %v102
    %v104 = vshll.u32 920167782, %v89
    %v105 = vshrl.u32 1326507024, %v90
    %v106 = vor.u32 %v104, %v105
    %vm107 = vcmp.lt.s32.totalorder %v88, 1
    %vm108 = vcmp.lt.s32.totalorder %v88, 2
    %vm109 = vcmp.lt.s32.totalorder %v88, 3
    %vm110 = vcmp.lt.s32.totalorder %v88, 4
    %v111 = vsel %vm107, %v91, %v94
    %v112 = vsel %vm110, %v100, 2102212464
    %v113 = vsel %vm109, %v97, %v112
    %v114 = vsel %vm108, %v111, %v113
    %v115 = vsel %vm107, %v94, %v97
    %v116 = vsel %vm110, %v103, 920167782
    %v117 = vsel %vm109, %v100, %v116
    %v118 = vsel %vm108, %v115, %v117
    %v119 = vsel %vm107, %v97, %v100
    %v120 = vsel %vm110, %v106, 1326507024
    %v121 = vsel %vm109, %v103, %v120
    %v122 = vsel %vm108, %v119, %v121
    %v123 = vshll.u32 %v83, 8
    %v124 = vmul.u32.u64.compose %v123, %v122
    %v125 = vextract.low.u32 %v124
    %v126 = vextract.high.u32 %v124
    %v127 = vmul.u32.u64.compose %v123, %v118
    %v128 = vextract.low.u32 %v127
    %v129 = vextract.high.u32 %v127
    %v130 = vmul.u32 %v123, %v114
    %v131 = vadd.s32 %v126, %v128
    %vm132 = vc.u32 %v126, %v128
    %v133 = vadd.s32 %v129, 1
    %v134 = vsel %vm132, %v133, %v129
    %v135 = vadd.s32 %v130, %v134
    %v136 = vadd.s32 %v135, 536870912
    %v137 = vshrl.u32 %v136, 30
    %v138 = vshll.u32 %v137, 30
    %v139 = vsub.s32 %v135, %v138
    %vm140 = vcmp.lt.s32.totalorder %v139, 0
    %v141 = vsub.s32 0, %v139
    %v142 = vsel %vm140, %v141, %v139
    %v143 = vclz %v142
    %v144 = vsub.s32 %v143, 2
    %vm145 = vcmp.gt.s32.totalorder 0, %v144
    %v146 = vsel %vm145, 0, %v144
    %v147 = vsub.s32 32, %v146
    %v148 = vshll.u32 %v139, %v146
    %v149 = vshrl.u32 %v131, %v147
    %v150 = vor.u32 %v148, %v149
    %v151 = vsub.s32 4294967266, %v146
    %v152 = vadd.s32 %v151, 127
    %v153 = vshll.u32 %v152, 23
    %v154 = vor.u32 4788187, %v153
    %v155 = vand.u32 2147483647, %v154
    %v157 = vcvt.s32.f32 %v150
    %v158 = vmul.f32 %v157, %v155
    %v159 = vxor.u32 %v158, 2147483648
    %v160 = vsel %vm77, %v159, %v158
    %v161 = vsub.s32 4, %v137
    %v162 = vsel %vm77, %v161, %v137
    %v163 = vsel %vm76, %v74, %v160
    %v164 = vsel %vm76, 0, %v162
    %v165 = vcosq.f32.pop %v163
    %v166 = vsinq.f32.pop %v163
    %vm167 = vweird.f32 %v74
    %v168 = vand.u32 %v164, 3
    %vm169 = vcmp.lt.s32.totalorder %v168, 2
    %vm170 = vcmp.eq.s32.totalorder %v168, 0
    %v171 = vxor.u32 %v166, 2147483648
    %v172 = vsel %vm170, %v165, %v171
    %vm173 = vcmp.eq.s32.totalorder %v168, 2
    %v174 = vxor.u32 %v165, 2147483648
    %v175 = vsel %vm173, %v174, %v166
    %v176 = vsel %vm169, %v172, %v175
    %v177 = vsel %vm167, nan, %v176
    %v178 = vand.u32 2147483647, %v74
    %vm179 = vcmp.le.f32.partialorder %v178, 0.7853982
    %vm180 = vcmp.lt.s32.totalorder %v74, 0
    %v181 = vand.u32 %v74, 2139095040
    %v182 = vshrl.u32 %v181, 23
    %v183 = vsub.s32 %v182, 127
    %v184 = vand.u32 2147483647, %v74
    %v185 = vand.u32 %v184, 8388607
    %v186 = vor.u32 %v185, 8388608
    %v187 = vsub.s32 0, %v186
    %v188 = vadd.s32 %v183, 1
    %vm189 = vcmp.gt.s32.totalorder %v188, 0
    %v190 = vsel %vm189, %v188, 0
    %v191 = vshrl.u32 %v190, 5
    %v192 = vand.u32 %v190, 31
    %v193 = vsub.s32 32, %v192
    %v194 = vshrl.u32 683565275, %v193
    %v195 = vshll.u32 683565275, %v192
    %v196 = vshrl.u32 2475754826, %v193
    %v197 = vor.u32 %v195, %v196
    %v198 = vshll.u32 2475754826, %v192
    %v199 = vshrl.u32 2131351028, %v193
    %v200 = vor.u32 %v198, %v199
    %v201 = vshll.u32 2131351028, %v192
    %v202 = vshrl.u32 2102212464, %v193
    %v203 = vor.u32 %v201, %v202
    %v204 = vshll.u32 2102212464, %v192
    %v205 = vshrl.u32 920167782, %v193
    %v206 = vor.u32 %v204, %v205
    %v207 = vshll.u32 920167782, %v192
    %v208 = vshrl.u32 1326507024, %v193
    %v209 = vor.u32 %v207, %v208
    %vm210 = vcmp.lt.s32.totalorder %v191, 1
    %vm211 = vcmp.lt.s32.totalorder %v191, 2
    %vm212 = vcmp.lt.s32.totalorder %v191, 3
    %vm213 = vcmp.lt.s32.totalorder %v191, 4
    %v214 = vsel %vm210, %v194, %v197
    %v215 = vsel %vm213, %v203, 2102212464
    %v216 = vsel %vm212, %v200, %v215
    %v217 = vsel %vm211, %v214, %v216
    %v218 = vsel %vm210, %v197, %v200
    %v219 = vsel %vm213, %v206, 920167782
    %v220 = vsel %vm212, %v203, %v219
    %v221 = vsel %vm211, %v218, %v220
    %v222 = vsel %vm210, %v200, %v203
    %v223 = vsel %vm213, %v209, 1326507024
    %v224 = vsel %vm212, %v206, %v223
    %v225 = vsel %vm211, %v222, %v224
    %v226 = vshll.u32 %v186, 8
    %v227 = vmul.u32.u64.compose %v226, %v225
    %v228 = vextract.low.u32 %v227
    %v229 = vextract.high.u32 %v227
    %v230 = vmul.u32.u64.compose %v226, %v221
    %v231 = vextract.low.u32 %v230
    %v232 = vextract.high.u32 %v230
    %v233 = vmul.u32 %v226, %v217
    %v234 = vadd.s32 %v229, %v231
    %vm235 = vc.u32 %v229, %v231
    %v236 = vadd.s32 %v232, 1
    %v237 = vsel %vm235, %v236, %v232
    %v238 = vadd.s32 %v233, %v237
    %v239 = vadd.s32 %v238, 536870912
    %v240 = vshrl.u32 %v239, 30
    %v241 = vshll.u32 %v240, 30
    %v242 = vsub.s32 %v238, %v241
    %vm243 = vcmp.lt.s32.totalorder %v242, 0
    %v244 = vsub.s32 0, %v242
    %v245 = vsel %vm243, %v244, %v242
    %v246 = vclz %v245
    %v247 = vsub.s32 %v246, 2
    %vm248 = vcmp.gt.s32.totalorder 0, %v247
    %v249 = vsel %vm248, 0, %v247
    %v250 = vsub.s32 32, %v249
    %v251 = vshll.u32 %v242, %v249
    %v252 = vshrl.u32 %v234, %v250
    %v253 = vor.u32 %v251, %v252
    %v254 = vsub.s32 4294967266, %v249
    %v255 = vadd.s32 %v254, 127
    %v256 = vshll.u32 %v255, 23
    %v257 = vor.u32 4788187, %v256
    %v258 = vand.u32 2147483647, %v257
    %v260 = vcvt.s32.f32 %v253
    %v261 = vmul.f32 %v260, %v258
    %v262 = vxor.u32 %v261, 2147483648
    %v263 = vsel %vm180, %v262, %v261
    %v264 = vsub.s32 4, %v240
    %v265 = vsel %vm180, %v264, %v240
    %v266 = vsel %vm179, %v74, %v263
    %v267 = vsel %vm179, 0, %v265
    %v268 = vcosq.f32.pop %v266
    %v269 = vsinq.f32.pop %v266
    %vm270 = vweird.f32 %v74
    %v271 = vadd.s32 %v267, 3
    %v272 = vand.u32 %v271, 3
    %vm273 = vcmp.lt.s32.totalorder %v272, 2
    %vm274 = vcmp.eq.s32.totalorder %v272, 0
    %v275 = vxor.u32 %v269, 2147483648
    %v276 = vsel %vm274, %v268, %v275
    %vm277 = vcmp.eq.s32.totalorder %v272, 2
    %v278 = vxor.u32 %v268, 2147483648
    %v279 = vsel %vm277, %v278, %v269
    %v280 = vsel %vm273, %v276, %v279
    %v281 = vsel %vm270, nan, %v280
    %283 = vrot.lane.b32.xlu0 %v281, 16
    %v284 = vpop.permute.xlu0 %283
    %vm286 = vcmask 130048
    %v287 = vsel %vm286, %v177, %v284
    %v288 = vld [vmem:[#allocation5] sm:$0xff]
    %v289 = vld [vmem:[#allocation5 + $0x8] sm:$0xff]
    %v290 = vld [vmem:[#allocation5 + $0x10] sm:$0xff]
    %v291 = vld [vmem:[#allocation5 + $0x18] sm:$0xff]
    %vm292 = vcmask 261120
    %v294 = vsel %vm292, %v287, 0
    %296 = vmatprep.subr.mxu0 0.0
    %297 = vmatpush1.msra.mxu0 %v288
    %298 = vmatprep.subr.mxu0 0.0
    %299 = vmatpush1.msra.mxu0 %v289
    %300 = vmatprep.subr.mxu0 0.0
    %301 = vmatpush1.msra.mxu0 %v290
    %302 = vmatprep.subr.mxu0 0.0
    %303 = vmatpush1.msra.mxu0 %v291
    %304 = vmatprep.subr.mxu0 0.0
    %305 = vmatpush1.msra.mxu0 0.0
    %306 = vmatprep.subr.mxu0 0.0
    %307 = vmatpush1.msra.mxu0 0.0
    %308 = vmatprep.subr.mxu0 0.0
    %309 = vmatpush1.msra.mxu0 0.0
    %310 = vmatprep.subr.mxu0 0.0
    %311 = vmatpush1.msra.mxu0 0.0
    %312 = vmatprep.subr.mxu0 0.0
    %313 = vmatpush1.msra.mxu0 0.0
    %314 = vmatprep.subr.mxu0 0.0
    %315 = vmatpush1.msra.mxu0 0.0
    %316 = vmatprep.subr.mxu0 0.0
    %317 = vmatpush1.msra.mxu0 0.0
    %318 = vmatprep.subr.mxu0 0.0
    %319 = vmatpush1.msra.mxu0 0.0
    %320 = vmatprep.subr.mxu0 0.0
    %321 = vmatpush1.msra.mxu0 0.0
    %322 = vmatprep.subr.mxu0 0.0
    %323 = vmatpush1.msra.mxu0 0.0
    %324 = vmatprep.subr.mxu0 0.0
    %325 = vmatpush1.msra.mxu0 0.0
    %326 = vmatprep.subr.mxu0 0.0
    %327 = vmatpush1.msra.mxu0 0.0
    %328 = vmatprep.subr.mxu0 0.0
    %329 = vmatpush1.msra.mxu0 0.0
    %330 = vmatprep.subr.mxu0 0.0
    %331 = vmatpush1.msra.mxu0 0.0
    %332 = vmatprep.subr.mxu0 0.0
    %333 = vmatpush1.msra.mxu0 0.0
    %334 = vmatprep.subr.mxu0 0.0
    %335 = vmatpush1.msra.mxu0 0.0
    %336 = vmatprep.subr.mxu0 0.0
    %337 = vmatpush1.msra.mxu0 0.0
    %338 = vmatprep.subr.mxu0 0.0
    %339 = vmatpush1.msra.mxu0 0.0
    %340 = vmatprep.subr.mxu0 0.0
    %341 = vmatpush1.msra.mxu0 0.0
    %342 = vmatprep.subr.mxu0 0.0
    %343 = vmatpush1.msra.mxu0 0.0
    %344 = vmatprep.subr.mxu0 0.0
    %345 = vmatpush1.msra.mxu0 0.0
    %346 = vmatprep.subr.mxu0 0.0
    %347 = vmatpush1.msra.mxu0 0.0
    %348 = vmatprep.subr.mxu0 0.0
    %349 = vmatpush1.msra.mxu0 0.0
    %350 = vmatprep.subr.mxu0 0.0
    %351 = vmatpush1.msra.mxu0 0.0
    %352 = vmatprep.subr.mxu0 0.0
    %353 = vmatpush1.msra.mxu0 0.0
    %354 = vmatprep.subr.mxu0 0.0
    %355 = vmatpush1.msra.mxu0 0.0
    %356 = vmatprep.subr.mxu0 0.0
    %357 = vmatpush1.msra.mxu0 0.0
    %358 = vmatprep.subr.mxu0 0.0
    %359 = vmatpush1.msra.mxu0 0.0
    %360 = vmatprep.mubr.f32.mxu0 0.0
    %361 = vmatmul.mubr.f32.gmra.mrb[0].mxu0 %v294
    %v362 = vpop.f32.mrb[0].mxu0
    %v363 = vadd.f32 0.0, %v362
    %v364 = vpop.f32.mrb[0].mxu0
    %365 = vdwg.mxu0
    %v366 = vsub.f32 %v363, 1.0
    %v367 = vmul.f32 %v366, 6.8284273
    %v368 = vmul.f32 %v367, 1.442695
    %v369 = vpow.pop %v368
    %v370 = vld [vmem:[#allocation7] sm:$0xff]
    %v371 = vld [vmem:[#allocation7 + $0x8] sm:$0xff]
    %373 = vrot.lane.b32.xlu0 %v74, 112
    %v374 = vpop.permute.xlu0 %373
    %v375 = vsel %vm286, %v374, 0
    %377 = vmatprep.subr.mxu0 0.0
    %378 = vmatpush1.msra.mxu0 %v370
    %379 = vmatprep.subr.mxu0 0.0
    %380 = vmatpush1.msra.mxu0 %v371
    %381 = vmatprep.subr.mxu0 0.0
    %382 = vmatpush1.msra.mxu0 0.0
    %383 = vmatprep.subr.mxu0 0.0
    %384 = vmatpush1.msra.mxu0 0.0
    %385 = vmatprep.subr.mxu0 0.0
    %386 = vmatpush1.msra.mxu0 0.0
    %387 = vmatprep.subr.mxu0 0.0
    %388 = vmatpush1.msra.mxu0 0.0
    %389 = vmatprep.subr.mxu0 0.0
    %390 = vmatpush1.msra.mxu0 0.0
    %391 = vmatprep.subr.mxu0 0.0
    %392 = vmatpush1.msra.mxu0 0.0
    %393 = vmatprep.subr.mxu0 0.0
    %394 = vmatpush1.msra.mxu0 0.0
    %395 = vmatprep.subr.mxu0 0.0
    %396 = vmatpush1.msra.mxu0 0.0
    %397 = vmatprep.subr.mxu0 0.0
    %398 = vmatpush1.msra.mxu0 0.0
    %399 = vmatprep.subr.mxu0 0.0
    %400 = vmatpush1.msra.mxu0 0.0
    %401 = vmatprep.subr.mxu0 0.0
    %402 = vmatpush1.msra.mxu0 0.0
    %403 = vmatprep.subr.mxu0 0.0
    %404 = vmatpush1.msra.mxu0 0.0
    %405 = vmatprep.subr.mxu0 0.0
    %406 = vmatpush1.msra.mxu0 0.0
    %407 = vmatprep.subr.mxu0 0.0
    %408 = vmatpush1.msra.mxu0 0.0
    %409 = vmatprep.subr.mxu0 0.0
    %410 = vmatpush1.msra.mxu0 0.0
    %411 = vmatprep.subr.mxu0 0.0
    %412 = vmatpush1.msra.mxu0 0.0
    %413 = vmatprep.subr.mxu0 0.0
    %414 = vmatpush1.msra.mxu0 0.0
    %415 = vmatprep.subr.mxu0 0.0
    %416 = vmatpush1.msra.mxu0 0.0
    %417 = vmatprep.subr.mxu0 0.0
    %418 = vmatpush1.msra.mxu0 0.0
    %419 = vmatprep.subr.mxu0 0.0
    %420 = vmatpush1.msra.mxu0 0.0
    %421 = vmatprep.subr.mxu0 0.0
    %422 = vmatpush1.msra.mxu0 0.0
    %423 = vmatprep.subr.mxu0 0.0
    %424 = vmatpush1.msra.mxu0 0.0
    %425 = vmatprep.subr.mxu0 0.0
    %426 = vmatpush1.msra.mxu0 0.0
    %427 = vmatprep.subr.mxu0 0.0
    %428 = vmatpush1.msra.mxu0 0.0
    %429 = vmatprep.subr.mxu0 0.0
    %430 = vmatpush1.msra.mxu0 0.0
    %431 = vmatprep.subr.mxu0 0.0
    %432 = vmatpush1.msra.mxu0 0.0
    %433 = vmatprep.subr.mxu0 0.0
    %434 = vmatpush1.msra.mxu0 0.0
    %435 = vmatprep.subr.mxu0 0.0
    %436 = vmatpush1.msra.mxu0 0.0
    %437 = vmatprep.subr.mxu0 0.0
    %438 = vmatpush1.msra.mxu0 0.0
    %439 = vmatprep.subr.mxu0 0.0
    %440 = vmatpush1.msra.mxu0 0.0
    %441 = vmatprep.mubr.f32.mxu0 0.0
    %442 = vmatmul.mubr.f32.gmra.mrb[0].mxu0 %v375
    %v443 = vpop.f32.mrb[0].mxu0
    %v444 = vadd.f32 0.0, %v443
    %v445 = vpop.f32.mrb[0].mxu0
    %446 = vdwg.mxu0
    %v447 = vmul.f32 %v369, %v444
    %v448 = vld [vmem:[#allocation8] sm:$0xff]
    %v449 = vld [vmem:[#allocation8 + $0x8] sm:$0xff]
    %v450 = vld [vmem:[#allocation8 + $0x10] sm:$0xff]
    %v451 = vld [vmem:[#allocation8 + $0x18] sm:$0xff]
    %v452 = vld [vmem:[#allocation8 + $0x20] sm:$0xff]
    %v453 = vld [vmem:[#allocation8 + $0x28] sm:$0xff]
    %v454 = vld [vmem:[#allocation8 + $0x30] sm:$0xff]
    %v455 = vld [vmem:[#allocation8 + $0x38] sm:$0xff]
    %v456 = vld [vmem:[#allocation8 + $0x40] sm:$0xff]
    %v457 = vld [vmem:[#allocation8 + $0x48] sm:$0xff]
    %v458 = vld [vmem:[#allocation8 + $0x50] sm:$0xff]
    %v459 = vld [vmem:[#allocation8 + $0x58] sm:$0xff]
    %v460 = vld [vmem:[#allocation8 + $0x60] sm:$0xff]
    %v461 = vld [vmem:[#allocation8 + $0x68] sm:$0xff]
    %v462 = vld [vmem:[#allocation8 + $0x70] sm:$0xff]
    %v463 = vld [vmem:[#allocation8 + $0x78] sm:$0xff]
    %v464 = vld [vmem:[%s4] sm:$0x1]
    %v466 = vlaneseq
    %v467 = vshrl.u32 %v466, 7
    %v468 = vsub.s32 0, %v467
    %v469 = vrot.slane %v464, %v468
    %471 = vmatprep.subr.mxu0 0.0
    %472 = vmatpush1.msra.mxu0 %v448
    %473 = vmatprep.subr.mxu0 0.0
    %474 = vmatpush1.msra.mxu0 %v449
    %475 = vmatprep.subr.mxu0 0.0
    %476 = vmatpush1.msra.mxu0 %v450
    %477 = vmatprep.subr.mxu0 0.0
    %478 = vmatpush1.msra.mxu0 %v451
    %479 = vmatprep.subr.mxu0 0.0
    %480 = vmatpush1.msra.mxu0 %v452
    %481 = vmatprep.subr.mxu0 0.0
    %482 = vmatpush1.msra.mxu0 %v453
    %483 = vmatprep.subr.mxu0 0.0
    %484 = vmatpush1.msra.mxu0 %v454
    %485 = vmatprep.subr.mxu0 0.0
    %486 = vmatpush1.msra.mxu0 %v455
    %487 = vmatprep.subr.mxu0 0.0
    %488 = vmatpush1.msra.mxu0 %v456
    %489 = vmatprep.subr.mxu0 0.0
    %490 = vmatpush1.msra.mxu0 %v457
    %491 = vmatprep.subr.mxu0 0.0
    %492 = vmatpush1.msra.mxu0 %v458
    %493 = vmatprep.subr.mxu0 0.0
    %494 = vmatpush1.msra.mxu0 %v459
    %495 = vmatprep.subr.mxu0 0.0
    %496 = vmatpush1.msra.mxu0 %v460
    %497 = vmatprep.subr.mxu0 0.0
    %498 = vmatpush1.msra.mxu0 %v461
    %499 = vmatprep.subr.mxu0 0.0
    %500 = vmatpush1.msra.mxu0 %v462
    %501 = vmatprep.subr.mxu0 0.0
    %502 = vmatpush1.msra.mxu0 %v463
    %503 = vmatprep.subr.mxu0 0.0
    %504 = vmatpush1.msra.mxu0 0.0
    %505 = vmatprep.subr.mxu0 0.0
    %506 = vmatpush1.msra.mxu0 0.0
    %507 = vmatprep.subr.mxu0 0.0
    %508 = vmatpush1.msra.mxu0 0.0
    %509 = vmatprep.subr.mxu0 0.0
    %510 = vmatpush1.msra.mxu0 0.0
    %511 = vmatprep.subr.mxu0 0.0
    %512 = vmatpush1.msra.mxu0 0.0
    %513 = vmatprep.subr.mxu0 0.0
    %514 = vmatpush1.msra.mxu0 0.0
    %515 = vmatprep.subr.mxu0 0.0
    %516 = vmatpush1.msra.mxu0 0.0
    %517 = vmatprep.subr.mxu0 0.0
    %518 = vmatpush1.msra.mxu0 0.0
    %519 = vmatprep.subr.mxu0 0.0
    %520 = vmatpush1.msra.mxu0 0.0
    %521 = vmatprep.subr.mxu0 0.0
    %522 = vmatpush1.msra.mxu0 0.0
    %523 = vmatprep.subr.mxu0 0.0
    %524 = vmatpush1.msra.mxu0 0.0
    %525 = vmatprep.subr.mxu0 0.0
    %526 = vmatpush1.msra.mxu0 0.0
    %527 = vmatprep.subr.mxu0 0.0
    %528 = vmatpush1.msra.mxu0 0.0
    %529 = vmatprep.subr.mxu0 0.0
    %530 = vmatpush1.msra.mxu0 0.0
    %531 = vmatprep.subr.mxu0 0.0
    %532 = vmatpush1.msra.mxu0 0.0
    %533 = vmatprep.subr.mxu0 0.0
    %534 = vmatpush1.msra.mxu0 0.0
    %535 = vmatprep.mubr.f32.mxu0 0.0
    %536 = vmatmul.mubr.f32.gmra.mrb[0].mxu0 %v447
    %v537 = vpop.f32.mrb[0].mxu0
    %v538 = vadd.f32 %v469, %v537
    %v539 = vpop.f32.mrb[0].mxu0
    %540 = vdwg.mxu0
    %541 = vst [vmem:[#allocation10] sm:$0xff] %v538
    // Predicated region
    $region38: #{tpu_custom_call.1} parent=1 // pred_check
      _
    $region39: #{tpu_custom_call.1} parent=1 // pred_check_branch
      %543 = sbr.rel (0) target = $region41
    $region40: #{tpu_custom_call.1} parent=1 // pred_region
      %s545 = ssub.s32 128, 128
      %546 = vsyncadd [#allocation4], %s545
      %s548 = sshll.u32 [#allocation10], 4
      %s549 = int_to_ptr.vmem [resolvable:$true] %s548
      %551 = dma.vmem_to_hbm [thread:$0]  %s549, 128, %s5, [#allocation4]
    $region41: #{tpu_custom_call.1} parent=1 // pred_fallthru
      _
    // Predicated region
    $region42: #{tpu_custom_call.1} parent=1 // pred_check
      _
    $region43: #{tpu_custom_call.1} parent=1 // pred_check_branch
      %553 = sbr.rel (0) target = $region45
    $region44: #{tpu_custom_call.1} parent=1 // pred_region
      %554 = dma.done [#allocation4], 128
    $region45: #{tpu_custom_call.1} parent=1 // pred_fallthru
      _
    %555 = vsyncpa [#allocation3], 1
    %556 = vsyncpa [#allocation6], 1
    %557 = vsyncpa [#allocation9], 1
    %558 = vsyncpa [#allocation4], 1

</llo_original>
